<compile_context>
chip_gen: v6e
topology: v6e:2x2x1
jax: 0.10.0
libtpu: 0.0.40
codegen_flags: <defaults>
</compile_context>

<pallas_src>
import jax
import jax.numpy as jnp
from jax.experimental import pallas as pl
from jax.experimental.pallas import tpu as pltpu


def _scale_kernel(scale_ref, x_ref, o_ref):
    # scale_ref: (1,) f32 in SMEM; x_ref/o_ref: lane-dense VMEM tiles (same dtype).
    s = scale_ref[0]
    x = x_ref[...]
    if jnp.issubdtype(x.dtype, jnp.floating) and x.dtype != jnp.float32:
        # bf16 / fp8: multiply in the native dtype (v6e/v7x have bf16 VALUs; on v5e
        # Mosaic handles the widening internally).  Avoids a full-tile f32 round-trip.
        o_ref[...] = x * s.astype(x.dtype)
    elif jnp.issubdtype(x.dtype, jnp.floating):
        o_ref[...] = x * s
    else:
        # Integer inputs: scale in f32 and round to nearest (avoid truncation bias).
        o_ref[...] = jnp.rint(x.astype(jnp.float32) * s).astype(o_ref.dtype)


def scale_forward(
    x: jax.Array,
    scale: jax.Array,
    *,
    min_pallas_elems: int = 1 << 19,    # below this, plain XLA beats a kernel launch
    target_block_bytes: int = 4 << 20,  # ~4 MiB blocks: ~86% of HBM roofline (v6e meas.)
    force_pallas: bool = False,         # force the Pallas path even for tiny inputs
    donate_input: bool = False,         # alias x -> out (caller must donate the buffer)
) -> jax.Array:
    """out = x * scale, where `scale` is a shape-(1,) fp32 learnable parameter."""
    orig_shape = x.shape
    orig_dtype = x.dtype
    n = x.size

    scale_f32 = jnp.asarray(scale, dtype=jnp.float32).reshape((1,))

    # Dtype-aware minimum sublane multiple: 8 (f32), 16 (bf16), 32 (int8/fp8).
    itemsize = jnp.dtype(orig_dtype).itemsize
    sub_mult = max(8, 32 // itemsize)

    def _xla_fallback():
        if jnp.issubdtype(orig_dtype, jnp.floating):
            # Mirror the kernel's math so both paths agree bit-for-bit (mod 1 ulp).
            return x * scale_f32[0].astype(orig_dtype)
        return jnp.rint(x.astype(jnp.float32) * scale_f32[0]).astype(orig_dtype)

    # Tiny inputs: kernel launch overhead dominates; let XLA fuse it.
    if not force_pallas and n < min_pallas_elems:
        return _xla_fallback()

    # Copy-free lane-dense factorization n == rows * lanes with wide lanes.
    # Only n % lanes == 0 is required — the cdiv grid masks a partial last row-block.
    lanes = None
    for cand in (2048, 1024, 512, 256, 128):
        if n % cand == 0 and (n // cand) >= sub_mult:
            lanes = cand
            break
    if lanes is None:
        for cand in (2048, 1024, 512, 256, 128):
            if n % cand == 0:
                lanes = cand
                break
    if lanes is None:
        # Ragged element count: no copy-free lane-dense reshape available.
        # TODO(synk): handle ragged tails with a 1D cdiv grid + masked last block
        #             instead of falling back to XLA.
        return _xla_fallback()

    rows = n // lanes
    x2d = x.reshape(rows, lanes)  # contiguous reshape: no data movement

    # Pick tile_rows so one block is ~target_block_bytes, a multiple of sub_mult.
    row_bytes = lanes * itemsize
    if rows <= sub_mult:
        tile_rows = rows  # full-dim block (allowed even if not sublane-aligned)
    else:
        tile_rows = min(rows, max(sub_mult, target_block_bytes // row_bytes))
        tile_rows = max(sub_mult, (tile_rows // sub_mult) * sub_mult)
        # Target >= 4 grid steps (>= 2 per v7x TensorCore) for balance + pipelining.
        min_steps = 4
        if pl.cdiv(rows, tile_rows) < min_steps and rows >= min_steps * sub_mult:
            tile_rows = max(sub_mult, (rows // min_steps // sub_mult) * sub_mult)

    grid = (pl.cdiv(rows, tile_rows),)

    # Explicit scoped-VMEM budget: in + out, double-buffered = 4x block, plus slack.
    # Safe on v5e (16 MiB scoped default overridden; 128 MiB physical) and within
    # v7x's 32 MiB scoped default / 64 MiB physical.
    block_bytes = tile_rows * lanes * itemsize
    vmem_limit_bytes = max(8 << 20, 4 * block_bytes + (2 << 20))

    call_kwargs = {}
    if donate_input:
        # x2d is input index 1 (scale is 0); output index 0.  Caller must donate x.
        call_kwargs["input_output_aliases"] = {1: 0}

    out2d = pl.pallas_call(
        _scale_kernel,
        out_shape=jax.ShapeDtypeStruct((rows, lanes), orig_dtype),
        grid_spec=pltpu.PrefetchScalarGridSpec(
            num_scalar_prefetch=0,
            grid=grid,
            in_specs=[
                pl.BlockSpec(memory_space=pltpu.SMEM),             # f32 scale scalar
                pl.BlockSpec((tile_rows, lanes), lambda i: (i, 0)),
            ],
            out_specs=pl.BlockSpec((tile_rows, lanes), lambda i: (i, 0)),
        ),
        compiler_params=pltpu.CompilerParams(
            dimension_semantics=("parallel",),
            vmem_limit_bytes=vmem_limit_bytes,
        ),
        **call_kwargs,
    )(scale_f32, x2d)

    return out2d.reshape(orig_shape)


if __name__ == "__main__":
    key = jax.random.PRNGKey(0)

    # Deterministic parameter, matching nn.Parameter(torch.FloatTensor([init_value]))
    init_value = 1.0
    scale_param = jnp.array([init_value * 1.5], dtype=jnp.float32)  # perturbed so op is visible

    # 1) Module-typical SMALL NCHW input.
    x_small = jax.random.normal(key, (2, 4, 16, 16), dtype=jnp.float32)
    ref_small = x_small * scale_param[0]
    #    a) default heuristic: tiny tensor -> XLA fast path (avoids launch overhead)
    out_small = jax.block_until_ready(scale_forward(x_small, scale_param))
    assert out_small.shape == x_small.shape and out_small.dtype == x_small.dtype
    assert jnp.allclose(out_small, ref_small, atol=1e-6, rtol=1e-6)
    #    b) forced through the Pallas kernel at the module's shape
    out_small_k = jax.block_until_ready(
        scale_forward(x_small, scale_param, force_pallas=True)
    )
    assert out_small_k.shape == x_small.shape and out_small_k.dtype == x_small.dtype
    assert jnp.allclose(out_small_k, ref_small, atol=1e-6, rtol=1e-6)

    # 2) Larger f32 input -> Pallas path (wide lanes, >=4 grid steps).
    k1, k2 = jax.random.split(key)
    x_big = jax.random.normal(k1, (2, 8, 128, 256), dtype=jnp.float32)
    out_big = jax.block_until_ready(scale_forward(x_big, scale_param))
    ref_big = x_big * scale_param[0]
    assert out_big.shape == x_big.shape and out_big.dtype == x_big.dtype
    assert jnp.allclose(out_big, ref_big, atol=1e-6, rtol=1e-6)

    # 3) bf16 input: native-dtype math in-kernel; output stays bf16.
    x_bf16 = jax.random.normal(k2, (2, 8, 128, 256), dtype=jnp.bfloat16)
    out_bf16 = jax.block_until_ready(scale_forward(x_bf16, scale_param))
    ref_bf16 = (x_bf16.astype(jnp.float32) * scale_param[0]).astype(jnp.bfloat16)
    assert out_bf16.dtype == jnp.bfloat16
    assert jnp.allclose(
        out_bf16.astype(jnp.float32), ref_bf16.astype(jnp.float32), atol=1e-2, rtol=1e-2
    )

    # 4) Ragged element count (no 128 divisor) -> XLA fallback path, still correct.
    x_rag = jax.random.normal(k1, (2, 3, 15, 17), dtype=jnp.float32)
    out_rag = jax.block_until_ready(scale_forward(x_rag, scale_param))
    assert jnp.allclose(out_rag, x_rag * scale_param[0], atol=1e-6, rtol=1e-6)

    print("KERNEL_OK")
</pallas_src>

<mosaic_0001>
module attributes {stable_mosaic.version = 11 : i64} {
  func.func @_scale_kernel(%arg0: i32, %arg1: memref<1xf32, #tpu.memory_space<smem>>, %arg2: memref<8x256xf32, #tpu.memory_space<vmem>>, %arg3: memref<8x256xf32, #tpu.memory_space<vmem>>) attributes {dimension_semantics = [#tpu.dimension_semantics<parallel>], iteration_bounds = array<i64: 1>, scalar_prefetch = 0 : i64, scratch_operands = 0 : i64, tpu.core_type = #tpu.core_type<tc>, window_params = [{transform_indices = @transform_0, window_bounds = array<i64: 1>}, {transform_indices = @transform_1, window_bounds = array<i64: 8, 256>}, {transform_indices = @transform_2, window_bounds = array<i64: 8, 256>}]} {
    %c0 = arith.constant 0 : index
    %0 = memref.load %arg1[%c0] : memref<1xf32, #tpu.memory_space<smem>>
    %c0_0 = arith.constant 0 : index
    %c0_1 = arith.constant 0 : index
    %1 = vector.load %arg2[%c0_0, %c0_1] : memref<8x256xf32, #tpu.memory_space<vmem>>, vector<8x256xf32>
    %2 = vector.broadcast %0 : f32 to vector<8x256xf32>
    %3 = arith.mulf %1, %2 : vector<8x256xf32>
    %c0_2 = arith.constant 0 : index
    %c0_3 = arith.constant 0 : index
    %4 = vector.load %arg3[%c0_2, %c0_3] : memref<8x256xf32, #tpu.memory_space<vmem>>, vector<8x256xf32>
    tpu.vector_store %arg3[%c0_2, %c0_3], %3 {strides = array<i32>} : memref<8x256xf32, #tpu.memory_space<vmem>>, vector<8x256xf32>,
    return
  }
  func.func @transform_0(%arg0: i32) -> i32 {
    %c0_i32 = arith.constant 0 : i32
    %c0_i32_0 = arith.constant 0 : i32
    return %c0_i32 : i32
  }
  func.func @transform_1(%arg0: i32) -> (i32, i32) {
    %c0_i32 = arith.constant 0 : i32
    %c0_i32_0 = arith.constant 0 : i32
    return %arg0, %c0_i32 : i32, i32
  }
  func.func @transform_2(%arg0: i32) -> (i32, i32) {
    %c0_i32 = arith.constant 0 : i32
    %c0_i32_0 = arith.constant 0 : i32
    return %arg0, %c0_i32 : i32, i32
  }
}

</mosaic_0001>

<llo_original>
// kernel: tpu_custom_call.1
$region0: #{tpu_custom_call.1}
  #allocation0 [shape = 'u32[]', space=smem, size = 0x4, offset = 0x4, fixed_abs, tag = 'smem constant byte address 0x4 - core index']
  #allocation1 [shape = 'u32[144,128]{1,0:T(1,128)}', space=vmem, size = 0x12000, scoped, tag = 'internal scratch']
  #allocation2 [shape = 'f32[1]{0:T(128)S(6)}', space=smem, size = 0x200, scoped, tag = 'scoped memory for tpu_custom_call.1']
  %s0 = inlined_call_operand.<no memory space> [shape: f32[1], index: 0, kind: input, shape index: {}]
  %s1 = inlined_call_operand.hbm [shape: f32[8,256], index: 1, kind: input, shape index: {}]
  %s2 = inlined_call_operand.hbm [shape: f32[8,256], index: 2, kind: output, shape index: {}]
  %s3 = sld [smem:[#allocation0]]
  $region22: #{tpu_custom_call.1} parent=0
    _
  %s5 = ssub.s32 1, %s3
  %s6 = scalar_select 0, %s5, %s3
  %7 = sst [smem:[#allocation2]] %s0
  $region1: #{tpu_custom_call.1} parent=0
    #allocation3 [shape = 'u8[8192]{0}', space=vmem, size = 0x2000, scoped, tag = 'input window, operand 1, single buffered']
    #allocation4 [shape = 's32[1]{0}', space=sflag, size = 0x4, scoped, tag = 'scoped memory for tpu_custom_call.1']
    #allocation5 [shape = 's32[1]{0}', space=sflag, size = 0x4, scoped, tag = 'scoped memory for tpu_custom_call.1']
    #allocation6 [shape = 'u8[8192]{0}', space=vmem, size = 0x2000, scoped, tag = 'output window, operand 0, single buffered']
    %8 = vsyncpa [#allocation4], 0
    %9 = vsyncpa [#allocation5], 0
    // Predicated region
    $region2: #{tpu_custom_call.1} parent=1 // pred_check
      _
    $region3: #{tpu_custom_call.1} parent=1 // pred_check_branch
      %11 = sbr.rel (0) target = $region5
    $region4: #{tpu_custom_call.1} parent=1 // pred_region
      _
    $region5: #{tpu_custom_call.1} parent=1 // pred_fallthru
      _
    // Predicated region
    $region6: #{tpu_custom_call.1} parent=1 // pred_check
      _
    $region7: #{tpu_custom_call.1} parent=1 // pred_check_branch
      %13 = sbr.rel (0) target = $region9
    $region8: #{tpu_custom_call.1} parent=1 // pred_region
      %s15 = ssub.s32 256, 256
      %16 = vsyncadd [#allocation4], %s15
      %s18 = sshll.u32 [#allocation3], 4
      %s19 = int_to_ptr.vmem [resolvable:$true] %s18
      %21 = dma.hbm_to_vmem [thread:$0]  %s1, 256, %s19, [#allocation4]
    $region9: #{tpu_custom_call.1} parent=1 // pred_fallthru
      _
    // Predicated region
    $region10: #{tpu_custom_call.1} parent=1 // pred_check
      _
    $region11: #{tpu_custom_call.1} parent=1 // pred_check_branch
      %23 = sbr.rel (0) target = $region13
    $region12: #{tpu_custom_call.1} parent=1 // pred_region
      %24 = dma.done [#allocation4], 256
    $region13: #{tpu_custom_call.1} parent=1 // pred_fallthru
      _
    %s25 = sld [smem:[#allocation2]]
    %v26 = vld [vmem:[#allocation3] sm:$0xff]
    %v27 = vld [vmem:[#allocation3 + $0x8] sm:$0xff]
    %v28 = vstv %s25
    %v29 = vmul.f32 %v26, %v28
    %v30 = vmul.f32 %v27, %v28
    %31 = vst [vmem:[#allocation6] sm:$0xff] %v29
    %32 = vst [vmem:[#allocation6 + $0x8] sm:$0xff] %v30
    // Predicated region
    $region14: #{tpu_custom_call.1} parent=1 // pred_check
      _
    $region15: #{tpu_custom_call.1} parent=1 // pred_check_branch
      %34 = sbr.rel (0) target = $region17
    $region16: #{tpu_custom_call.1} parent=1 // pred_region
      %s36 = ssub.s32 256, 256
      %37 = vsyncadd [#allocation5], %s36
      %s39 = sshll.u32 [#allocation6], 4
      %s40 = int_to_ptr.vmem [resolvable:$true] %s39
      %42 = dma.vmem_to_hbm [thread:$0]  %s40, 256, %s2, [#allocation5]
    $region17: #{tpu_custom_call.1} parent=1 // pred_fallthru
      _
    // Predicated region
    $region18: #{tpu_custom_call.1} parent=1 // pred_check
      _
    $region19: #{tpu_custom_call.1} parent=1 // pred_check_branch
      %44 = sbr.rel (0) target = $region21
    $region20: #{tpu_custom_call.1} parent=1 // pred_region
      %45 = dma.done [#allocation5], 256
    $region21: #{tpu_custom_call.1} parent=1 // pred_fallthru
      _
    %46 = vsyncpa [#allocation4], 1
    %47 = vsyncpa [#allocation5], 1

</llo_original>
